<compile_context>
chip_gen: v5e
topology: v5e:2x2
jax: 0.10.0
libtpu: 0.0.40
codegen_flags: <defaults>
</compile_context>

<pallas_src>
import functools
import math

import jax
import jax.numpy as jnp
from jax.experimental import pallas as pl
from jax.experimental.pallas import tpu as pltpu


_MXU_DTYPE = jnp.bfloat16            # matmul operand dtype (f32 accumulation)
_INTERMEDIATE_DTYPE = jnp.bfloat16   # inter-kernel activations in HBM


def _compute_vmem_limit():
    """Per-generation VMEM budget with headroom under physical capacity."""
    try:
        info = pltpu.get_tpu_info()
        cap = int(getattr(info, "vmem_capacity_bytes", 0) or 0)
        if cap > 0:
            return max(min(cap - 8 * 1024 * 1024, 100 * 1024 * 1024),
                       32 * 1024 * 1024)
    except Exception:
        pass
    return 48 * 1024 * 1024


_VMEM_LIMIT = _compute_vmem_limit()


def _conv3x3_vmem_fits(tco, h, w, cin, vmem_limit):
    halo = (h + 2) * (w + 2) * cin * 2      # bf16 halo scratch
    acc = h * w * tco * 4                   # f32 accumulator scratch
    x_blk = h * w * cin * 4                 # worst case f32 input block
    w_blk = 9 * cin * tco * 2               # bf16 weight slice
    res = h * w * tco * 4
    out = h * w * tco * 4
    total = halo + acc + 2 * (x_blk + w_blk + res + out)   # double-buffered I/O
    return total <= int(vmem_limit * 0.9)


def _co_tile_conv3x3(cout, h, w, cin, vmem_limit):
    """Lane-dense output-channel tile: prefer 256 (v6e/v7x MXU N), then 128."""
    for tco in (256, 128):
        if cout % tco == 0 and _conv3x3_vmem_fits(tco, h, w, cin, vmem_limit):
            return tco
    if not _conv3x3_vmem_fits(cout, h, w, cin, vmem_limit):
        # TODO(synk): H-tiling with halo DMA instead of failing here.
        raise ValueError(
            f"conv3x3: no output-channel tile fits VMEM "
            f"(Cout={cout}, H={h}, W={w}, Cin={cin}, limit={vmem_limit})")
    return cout


def _co_tile_simple(cout):
    for t in (256, 128):
        if cout % t == 0:
            return t
    return cout


# ---------------------------------------------------------------------------
# GroupNorm(32) + SiLU helpers
# ---------------------------------------------------------------------------

def _group_matrix(C, groups, hw):
    """(C, C) f32 matrix: gmat[j, i] = 1/(hw*cg) if channels i, j share a group."""
    cg = C // groups
    gid = jnp.arange(C) // cg
    same = (gid[:, None] == gid[None, :]).astype(jnp.float32)
    return same / float(hw * cg)


def _gn_silu_value(x_ref, gmat_ref, gamma_ref, beta_ref, eps):
    """GN(32)+SiLU applied to the full (H, W, C) block of x_ref; returns f32."""
    H, W, C = x_ref.shape
    x = x_ref[...].astype(jnp.float32).reshape(H * W, C)
    s1 = jnp.sum(x, axis=0, keepdims=True)                      # (1, C)
    s2 = jnp.sum(x * x, axis=0, keepdims=True)                  # (1, C)
    gmat = gmat_ref[...]                                        # (C, C)
    mean = jnp.dot(s1, gmat, preferred_element_type=jnp.float32)
    ex2 = jnp.dot(s2, gmat, preferred_element_type=jnp.float32)
    var = jnp.maximum(ex2 - mean * mean, 0.0)
    inv = jax.lax.rsqrt(var + eps)
    scale = inv * gamma_ref[...].astype(jnp.float32)
    shift = beta_ref[...].astype(jnp.float32) - mean * scale
    y = x * scale + shift
    y = y * jax.nn.sigmoid(y)                                   # SiLU
    return y.reshape(H, W, C)


def _gn_silu_kernel(x_ref, gmat_ref, gamma_ref, beta_ref, o_ref, *, eps):
    o_ref[...] = _gn_silu_value(x_ref, gmat_ref, gamma_ref, beta_ref, eps
                                ).astype(o_ref.dtype)


def groupnorm_silu(x, gamma, beta, *, groups=32, eps=1e-5, out_dtype=None):
    """Fused GroupNorm(groups)+SiLU.  x: (N, H, W, C)."""
    N, H, W, C = x.shape
    out_dtype = out_dtype or x.dtype
    gmat = _group_matrix(C, groups, H * W)
    return pl.pallas_call(
        functools.partial(_gn_silu_kernel, eps=eps),
        out_shape=jax.ShapeDtypeStruct((N, H, W, C), out_dtype),
        grid=(N,),
        in_specs=[
            pl.BlockSpec((None, H, W, C), lambda n: (n, 0, 0, 0)),
            pl.BlockSpec((C, C), lambda n: (0, 0)),
            pl.BlockSpec((1, C), lambda n: (0, 0)),
            pl.BlockSpec((1, C), lambda n: (0, 0)),
        ],
        out_specs=pl.BlockSpec((None, H, W, C), lambda n: (n, 0, 0, 0)),
        compiler_params=pltpu.CompilerParams(
            dimension_semantics=("parallel",), vmem_limit_bytes=_VMEM_LIMIT),
    )(x, gmat, gamma, beta)


# GroupNorm(32)+SiLU+AvgPool2d(2,2) of h AND AvgPool2d(2,2) of x, one kernel,
# one read of x, pooling on register values (no VMEM scratch).
def _gn_silu_pool_kernel(x_ref, gmat_ref, gamma_ref, beta_ref,
                         h_ref, xs_ref, *, eps):
    Ho, Wo, C = h_ref.shape
    chunks = [x_ref[pl.ds(dh, Ho, stride=2), pl.ds(dw, Wo, stride=2), :]
              .astype(jnp.float32)
              for dh in (0, 1) for dw in (0, 1)]
    s1 = jnp.zeros((1, C), jnp.float32)
    s2 = jnp.zeros((1, C), jnp.float32)
    xs_acc = jnp.zeros((Ho, Wo, C), jnp.float32)
    for c in chunks:
        s1 = s1 + jnp.sum(jnp.sum(c, axis=0), axis=0, keepdims=True)
        s2 = s2 + jnp.sum(jnp.sum(c * c, axis=0), axis=0, keepdims=True)
        xs_acc = xs_acc + c
    gmat = gmat_ref[...]
    mean = jnp.dot(s1, gmat, preferred_element_type=jnp.float32)
    ex2 = jnp.dot(s2, gmat, preferred_element_type=jnp.float32)
    var = jnp.maximum(ex2 - mean * mean, 0.0)
    inv = jax.lax.rsqrt(var + eps)
    scale = inv * gamma_ref[...].astype(jnp.float32)             # (1, C)
    shift = beta_ref[...].astype(jnp.float32) - mean * scale     # (1, C)
    h_acc = jnp.zeros((Ho, Wo, C), jnp.float32)
    for c in chunks:
        y = c * scale + shift
        h_acc = h_acc + y * jax.nn.sigmoid(y)
    h_ref[...] = (h_acc * 0.25).astype(h_ref.dtype)
    xs_ref[...] = (xs_acc * 0.25).astype(xs_ref.dtype)


def groupnorm_silu_pool(x, gamma, beta, *, groups=32, eps=1e-5, out_dtype=None):
    """Returns (gn_silu_pooled_h, pooled_x) from one fused kernel."""
    N, H, W, C = x.shape
    assert H % 2 == 0 and W % 2 == 0
    out_dtype = out_dtype or x.dtype
    Ho, Wo = H // 2, W // 2
    gmat = _group_matrix(C, groups, H * W)
    out_spec = pl.BlockSpec((None, Ho, Wo, C), lambda n: (n, 0, 0, 0))
    return pl.pallas_call(
        functools.partial(_gn_silu_pool_kernel, eps=eps),
        out_shape=(jax.ShapeDtypeStruct((N, Ho, Wo, C), out_dtype),
                   jax.ShapeDtypeStruct((N, Ho, Wo, C), out_dtype)),
        grid=(N,),
        in_specs=[
            pl.BlockSpec((None, H, W, C), lambda n: (n, 0, 0, 0)),
            pl.BlockSpec((C, C), lambda n: (0, 0)),
            pl.BlockSpec((1, C), lambda n: (0, 0)),
            pl.BlockSpec((1, C), lambda n: (0, 0)),
        ],
        out_specs=(out_spec, out_spec),
        compiler_params=pltpu.CompilerParams(
            dimension_semantics=("parallel",), vmem_limit_bytes=_VMEM_LIMIT),
    )(x, gmat, gamma, beta)


# ---------------------------------------------------------------------------
# 3x3 conv (stride 1, pad 1) with fused GroupNorm+SiLU prologue (optional)
# and fused bias / per-sample embedding bias / residual add epilogue.
# ---------------------------------------------------------------------------

def _conv3x3_body(x_ref, w_ref, b_ref, gn_refs, cb_ref, res_ref, o_ref,
                  xp_scr, acc_scr, *, eps):
    H, W, Cin = x_ref.shape
    TCo = o_ref.shape[-1]
    co = pl.program_id(1)

    # Rebuild the halo scratch only when the batch index changes (co == 0);
    # the co grid axis is marked "arbitrary" so megacore never splits it.
    @pl.when(co == 0)
    def _build_halo():
        if gn_refs is not None:
            # Fused GroupNorm(32)+SiLU prologue (stats over the full plane).
            gmat_ref, gamma_ref, beta_ref = gn_refs
            y = _gn_silu_value(x_ref, gmat_ref, gamma_ref, beta_ref, eps)
            interior = y.astype(xp_scr.dtype)
        else:
            interior = x_ref[...].astype(xp_scr.dtype)
        # Zero only the 1-pixel border (4 strip stores), not the whole scratch.
        zrow = jnp.zeros((1, W + 2, Cin), xp_scr.dtype)
        zcol = jnp.zeros((H, 1, Cin), xp_scr.dtype)
        xp_scr[pl.ds(0, 1), :, :] = zrow
        xp_scr[pl.ds(H + 1, 1), :, :] = zrow
        xp_scr[pl.ds(1, H), pl.ds(0, 1), :] = zcol
        xp_scr[pl.ds(1, H), pl.ds(W + 1, 1), :] = zcol
        xp_scr[pl.ds(1, H), pl.ds(1, W), :] = interior

    # 9 accumulating K = Cin matmuls straight off the bf16 halo-scratch views,
    # accumulated into an f32 VMEM scratch.
    first = True
    for kh in range(3):
        for kw in range(3):
            tap = xp_scr[pl.ds(kh, H), pl.ds(kw, W), :].reshape(H * W, Cin)
            d = jnp.dot(tap, w_ref[kh * 3 + kw],
                        preferred_element_type=jnp.float32)
            if first:
                acc_scr[...] = d
                first = False
            else:
                acc_scr[...] += d

    acc = acc_scr[...] + b_ref[...].astype(jnp.float32)          # conv bias
    if cb_ref is not None:
        acc = acc + cb_ref[...].astype(jnp.float32)              # emb bias
    out = acc.reshape(H, W, TCo)
    if res_ref is not None:
        out = out + res_ref[...].astype(jnp.float32)             # residual/skip
    o_ref[...] = out.astype(o_ref.dtype)


def _make_conv3x3_kernel(has_gn, has_cb, has_res, eps):
    def kernel(*refs):
        it = list(refs)
        x_ref, w_ref, b_ref = it.pop(0), it.pop(0), it.pop(0)
        gn_refs = (it.pop(0), it.pop(0), it.pop(0)) if has_gn else None
        cb_ref = it.pop(0) if has_cb else None
        res_ref = it.pop(0) if has_res else None
        o_ref, xp_scr, acc_scr = it.pop(0), it.pop(0), it.pop(0)
        _conv3x3_body(x_ref, w_ref, b_ref, gn_refs, cb_ref, res_ref, o_ref,
                      xp_scr, acc_scr, eps=eps)
    return kernel


def conv3x3(x, w_hwio, bias, *, chan_bias=None, residual=None, gn=None,
            groups=32, eps=1e-5, out_dtype=None, mxu_dtype=_MXU_DTYPE):
    """Conv2d(k=3, s=1, p=1) in NHWC.  Optional fused GroupNorm+SiLU prologue
    (gn=(gamma, beta)), per-sample channel bias, and fused residual add."""
    N, H, W, Cin = x.shape
    kh_, kw_, cin_w, Cout = w_hwio.shape
    assert (kh_, kw_, cin_w) == (3, 3, Cin)
    out_dtype = out_dtype or x.dtype

    TCo = _co_tile_conv3x3(Cout, H, W, Cin, _VMEM_LIMIT)
    n_co = Cout // TCo

    w_packed = w_hwio.reshape(9, Cin, Cout).astype(mxu_dtype)
    b2 = bias.reshape(1, Cout)

    in_specs = [
        pl.BlockSpec((None, H, W, Cin), lambda n, co: (n, 0, 0, 0)),
        pl.BlockSpec((9, Cin, TCo), lambda n, co: (0, 0, co)),
        pl.BlockSpec((1, TCo), lambda n, co: (0, co)),
    ]
    args = [x, w_packed, b2]

    has_gn = gn is not None
    if has_gn:
        gamma, beta = gn
        gmat = _group_matrix(Cin, groups, H * W)
        in_specs += [
            pl.BlockSpec((Cin, Cin), lambda n, co: (0, 0)),
            pl.BlockSpec((1, Cin), lambda n, co: (0, 0)),
            pl.BlockSpec((1, Cin), lambda n, co: (0, 0)),
        ]
        args += [gmat, gamma.reshape(1, Cin), beta.reshape(1, Cin)]

    has_cb = chan_bias is not None
    if has_cb:
        in_specs.append(pl.BlockSpec((None, 1, TCo), lambda n, co: (n, 0, co)))
        args.append(chan_bias)

    has_res = residual is not None
    if has_res:
        assert residual.shape == (N, H, W, Cout)
        in_specs.append(
            pl.BlockSpec((None, H, W, TCo), lambda n, co: (n, 0, 0, co)))
        args.append(residual)

    return pl.pallas_call(
        _make_conv3x3_kernel(has_gn, has_cb, has_res, eps),
        out_shape=jax.ShapeDtypeStruct((N, H, W, Cout), out_dtype),
        grid=(N, n_co),
        in_specs=in_specs,
        out_specs=pl.BlockSpec((None, H, W, TCo), lambda n, co: (n, 0, 0, co)),
        scratch_shapes=[pltpu.VMEM((H + 2, W + 2, Cin), mxu_dtype),
                        pltpu.VMEM((H * W, TCo), jnp.float32)],
        compiler_params=pltpu.CompilerParams(
            # co must be "arbitrary": the halo rebuild is gated on co == 0.
            dimension_semantics=("parallel", "arbitrary"),
            vmem_limit_bytes=_VMEM_LIMIT),
    )(*args)


# ---------------------------------------------------------------------------
# 1x1 conv (skip connection when out_channel != channels and use_conv=False)
# ---------------------------------------------------------------------------

def _conv1x1_kernel(x_ref, w_ref, b_ref, o_ref, *, mxu_dtype):
    H, W, Cin = x_ref.shape
    TCo = o_ref.shape[-1]
    xm = x_ref[...].reshape(H * W, Cin).astype(mxu_dtype)
    acc = jnp.dot(xm, w_ref[...], preferred_element_type=jnp.float32)
    acc = acc + b_ref[...].astype(jnp.float32)
    o_ref[...] = acc.reshape(H, W, TCo).astype(o_ref.dtype)


def conv1x1(x, w_io, bias, *, out_dtype=None, mxu_dtype=_MXU_DTYPE):
    N, H, W, Cin = x.shape
    Cout = w_io.shape[1]
    out_dtype = out_dtype or x.dtype
    TCo = _co_tile_simple(Cout)
    n_co = Cout // TCo
    return pl.pallas_call(
        functools.partial(_conv1x1_kernel, mxu_dtype=mxu_dtype),
        out_shape=jax.ShapeDtypeStruct((N, H, W, Cout), out_dtype),
        grid=(N, n_co),
        in_specs=[
            pl.BlockSpec((None, H, W, Cin), lambda n, co: (n, 0, 0, 0)),
            pl.BlockSpec((Cin, TCo), lambda n, co: (0, co)),
            pl.BlockSpec((1, TCo), lambda n, co: (0, co)),
        ],
        out_specs=pl.BlockSpec((None, H, W, TCo), lambda n, co: (n, 0, 0, co)),
        compiler_params=pltpu.CompilerParams(
            dimension_semantics=("parallel", "arbitrary"),
            vmem_limit_bytes=_VMEM_LIMIT),
    )(x, w_io.astype(mxu_dtype), bias.reshape(1, Cout))


# ---------------------------------------------------------------------------
# Timestep-embedding MLP: SiLU -> Linear
# ---------------------------------------------------------------------------

def _emb_linear_kernel(e_ref, w_ref, b_ref, o_ref):
    e = e_ref[...].astype(jnp.float32)
    e = e * jax.nn.sigmoid(e)                                   # SiLU
    y = jnp.dot(e, w_ref[...].astype(jnp.float32),
                preferred_element_type=jnp.float32)
    o_ref[...] = (y + b_ref[...].astype(jnp.float32)).astype(o_ref.dtype)


def emb_linear(emb, w, b):
    N, E = emb.shape
    Co = w.shape[1]
    return pl.pallas_call(
        _emb_linear_kernel,
        out_shape=jax.ShapeDtypeStruct((N, Co), emb.dtype),
        grid=(1,),
        in_specs=[pl.BlockSpec((N, E), lambda i: (0, 0)),
                  pl.BlockSpec((E, Co), lambda i: (0, 0)),
                  pl.BlockSpec((1, Co), lambda i: (0, 0))],
        out_specs=pl.BlockSpec((N, Co), lambda i: (0, 0)),
        compiler_params=pltpu.CompilerParams(
            dimension_semantics=("arbitrary",), vmem_limit_bytes=_VMEM_LIMIT),
    )(emb, w, b.reshape(1, Co))


# ---------------------------------------------------------------------------
# ResBlock module
# ---------------------------------------------------------------------------

class ResBlockPallas:
    """JAX/Pallas port of guided_diffusion's ResBlock forward (eval mode)."""

    def __init__(self, channels, emb_channels, dropout, out_channel=None,
                 use_conv=False, use_scale_shift_norm=False, use_checkpoint=False,
                 up=False, down=False, *, key=None, dtype=jnp.float32):
        self.channels = channels
        self.emb_channels = emb_channels
        self.dropout = dropout          # TODO(synk): eval-mode only; training dropout (pltpu.prng_*) not implemented.
        self.out_channel = out_channel or channels
        self.use_conv = use_conv
        self.use_checkpoint = use_checkpoint   # gradient checkpointing: training-only, no-op for forward
        self.up = up
        self.down = down
        assert channels % 32 == 0 and self.out_channel % 32 == 0, \
            "GroupNorm(32) needs C % 32 == 0"
        # TODO(synk): use_scale_shift_norm=True (scale/shift-modulated GroupNorm) not implemented.
        assert not use_scale_shift_norm
        self.use_scale_shift_norm = use_scale_shift_norm

        if key is None:
            key = jax.random.PRNGKey(0)
        ks = jax.random.split(key, 4)
        C, Co, E = channels, self.out_channel, emb_channels

        def conv_init(k, ksz, cin, cout):
            k1, k2 = jax.random.split(k)
            bound = 1.0 / math.sqrt(cin * ksz * ksz)
            w = jax.random.uniform(k1, (ksz, ksz, cin, cout), dtype, -bound, bound)
            b = jax.random.uniform(k2, (cout,), dtype, -bound, bound)
            return w, b

        # in_layers: GroupNorm32 -> SiLU -> Conv3x3(C, Co)
        self.gn1_g = jnp.ones((1, C), dtype)
        self.gn1_b = jnp.zeros((1, C), dtype)
        self.w1, self.b1 = conv_init(ks[0], 3, C, Co)
        # emb_layers: SiLU -> Linear(E, Co)
        k1, k2 = jax.random.split(ks[1])
        bound = 1.0 / math.sqrt(E)
        self.we = jax.random.uniform(k1, (E, Co), dtype, -bound, bound)
        self.be = jax.random.uniform(k2, (Co,), dtype, -bound, bound)
        # out_layers: GroupNorm32 -> SiLU -> Dropout -> Conv3x3(Co, Co)
        # NOTE: guided_diffusion zero-initializes this conv (zero_module); random
        # init is used here so the numerical self-check actually exercises it.
        self.gn2_g = jnp.ones((1, Co), dtype)
        self.gn2_b = jnp.zeros((1, Co), dtype)
        self.w2, self.b2 = conv_init(ks[2], 3, Co, Co)
        # skip connection
        if Co == C:
            self.skip_kind = "identity"
            self.ws, self.bs = None, None
        elif use_conv:
            self.skip_kind = "conv3x3"
            self.ws, self.bs = conv_init(ks[3], 3, C, Co)
        else:
            self.skip_kind = "conv1x1"
            w, b = conv_init(ks[3], 1, C, Co)
            self.ws, self.bs = w.reshape(C, Co), b

    # -- public NCHW interface (matches PyTorch) ----------------------------
    def __call__(self, x_nchw, emb):
        assert x_nchw.shape[1] == self.channels
        x = jnp.transpose(x_nchw, (0, 2, 3, 1))      # single transpose at the edge
        y = self.forward_nhwc(x, emb)
        return jnp.transpose(y, (0, 3, 1, 2))

    # -- NHWC forward (no layout glue) ---------------------------------------
    def forward_nhwc(self, x, emb):
        N = x.shape[0]
        Co = self.out_channel
        idt = _INTERMEDIATE_DTYPE

        emb_out = emb_linear(emb, self.we, self.be).reshape(N, 1, Co)

        if self.down:
            # One kernel: GN+SiLU+avg-pool of h AND avg-pool of x (skip path).
            h_in, xs = groupnorm_silu_pool(x, self.gn1_g, self.gn1_b,
                                           out_dtype=idt)
            h = conv3x3(h_in, self.w1, self.b1, chan_bias=emb_out, out_dtype=idt)
        elif self.up:
            # TODO(synk): fuse the nearest-upsample into the conv halo build
            # instead of materializing the 4x tensors via XLA jnp.repeat.
            h_in = groupnorm_silu(x, self.gn1_g, self.gn1_b, out_dtype=idt)
            h_in = jnp.repeat(jnp.repeat(h_in, 2, axis=1), 2, axis=2)
            xs = jnp.repeat(jnp.repeat(x, 2, axis=1), 2, axis=2)
            h = conv3x3(h_in, self.w1, self.b1, chan_bias=emb_out, out_dtype=idt)
        else:
            xs = x
            # GN1+SiLU fused into conv1's prologue: no h round trip in HBM.
            h = conv3x3(x, self.w1, self.b1, chan_bias=emb_out,
                        gn=(self.gn1_g, self.gn1_b), out_dtype=idt)

        # skip connection
        if self.skip_kind == "identity":
            skip = xs
        elif self.skip_kind == "conv3x3":
            skip = conv3x3(xs, self.ws, self.bs, out_dtype=idt)
        else:
            skip = conv1x1(xs, self.ws, self.bs, out_dtype=idt)

        # out_layers: GN2+SiLU fused into conv2's prologue, Dropout is
        # eval-mode identity, residual add fused into conv2's epilogue.
        out = conv3x3(h, self.w2, self.b2, residual=skip,
                      gn=(self.gn2_g, self.gn2_b), out_dtype=x.dtype)
        return out


# ---------------------------------------------------------------------------
# Pure-JAX NCHW reference (mirrors the PyTorch ResBlock._forward, eval mode)
# ---------------------------------------------------------------------------

def _ref_gn_silu(x, g, b, groups=32, eps=1e-5):
    N, C, H, W = x.shape
    xr = x.astype(jnp.float32).reshape(N, groups, C // groups, H, W)
    mu = xr.mean(axis=(2, 3, 4), keepdims=True)
    var = ((xr - mu) ** 2).mean(axis=(2, 3, 4), keepdims=True)
    xn = ((xr - mu) * jax.lax.rsqrt(var + eps)).reshape(N, C, H, W)
    y = xn * g.reshape(1, C, 1, 1) + b.reshape(1, C, 1, 1)
    return y * jax.nn.sigmoid(y)


def _ref_conv(x, w_hwio, b):
    k = w_hwio.shape[0]
    pad = (k - 1) // 2
    w = jnp.transpose(w_hwio, (3, 2, 0, 1)).astype(jnp.float32)
    y = jax.lax.conv_general_dilated(
        x.astype(jnp.float32), w, (1, 1), ((pad, pad), (pad, pad)),
        dimension_numbers=("NCHW", "OIHW", "NCHW"))
    return y + b.reshape(1, -1, 1, 1).astype(jnp.float32)


def _ref_avgpool(x):
    N, C, H, W = x.shape
    return x.reshape(N, C, H // 2, 2, W // 2, 2).mean(axis=(3, 5))


def ref_resblock(m, x, emb):
    h = _ref_gn_silu(x, m.gn1_g, m.gn1_b)
    if m.down:
        h = _ref_avgpool(h)
        xs = _ref_avgpool(x)
    elif m.up:
        h = jnp.repeat(jnp.repeat(h, 2, axis=2), 2, axis=3)
        xs = jnp.repeat(jnp.repeat(x, 2, axis=2), 2, axis=3)
    else:
        xs = x
    h = _ref_conv(h, m.w1, m.b1)
    e = emb.astype(jnp.float32)
    e = e * jax.nn.sigmoid(e)
    emb_out = e @ m.we.astype(jnp.float32) + m.be.astype(jnp.float32)
    h = h + emb_out[:, :, None, None]
    h = _ref_gn_silu(h, m.gn2_g, m.gn2_b)
    h = _ref_conv(h, m.w2, m.b2)
    if m.skip_kind == "identity":
        skip = xs
    elif m.skip_kind == "conv3x3":
        skip = _ref_conv(xs, m.ws, m.bs)
    else:
        skip = _ref_conv(xs, m.ws.reshape(1, 1, m.channels, m.out_channel), m.bs)
    return skip + h


# ---------------------------------------------------------------------------

if __name__ == "__main__":
    key = jax.random.PRNGKey(0)
    kx, ke, kp1, kp2 = jax.random.split(key, 4)

    N, C, H, W, E = 2, 32, 16, 16, 16
    x = jax.random.normal(kx, (N, C, H, W), jnp.float32)
    emb = jax.random.normal(ke, (N, E), jnp.float32)

    # Config A: identity skip, no up/down (GN1 and GN2 fused into the convs).
    blk_a = ResBlockPallas(C, E, dropout=0.0, out_channel=C, key=kp1)
    y_a = jax.block_until_ready(blk_a(x, emb))
    r_a = ref_resblock(blk_a, x, emb)
    assert y_a.shape == (N, C, H, W)
    err_a = float(jnp.max(jnp.abs(y_a - r_a)))
    assert jnp.allclose(y_a, r_a, atol=5e-2, rtol=5e-2), err_a

    # Config B: down=True with a channel change (fused GN/pool + 1x1 skip conv).
    Co = 64
    blk_b = ResBlockPallas(C, E, dropout=0.0, out_channel=Co, down=True, key=kp2)
    y_b = jax.block_until_ready(blk_b(x, emb))
    r_b = ref_resblock(blk_b, x, emb)
    assert y_b.shape == (N, Co, H // 2, W // 2)
    err_b = float(jnp.max(jnp.abs(y_b - r_b)))
    assert jnp.allclose(y_b, r_b, atol=5e-2, rtol=5e-2), err_b

    print("KERNEL_OK")
</pallas_src>

<mosaic_0001>
module attributes {stable_mosaic.version = 11 : i64} {
  func.func @_emb_linear_kernel(%arg0: i32, %arg1: memref<2x16xf32, #tpu.memory_space<vmem>>, %arg2: memref<16x32xf32, #tpu.memory_space<vmem>>, %arg3: memref<1x32xf32, #tpu.memory_space<vmem>>, %arg4: memref<2x32xf32, #tpu.memory_space<vmem>>) attributes {dimension_semantics = [#tpu.dimension_semantics<arbitrary>], iteration_bounds = array<i64: 1>, scalar_prefetch = 0 : i64, scratch_operands = 0 : i64, tpu.core_type = #tpu.core_type<tc>, window_params = [{pipeline_mode = #tpu.pipeline_mode<synchronous>, transform_indices = @transform_0, window_bounds = array<i64: 2, 16>}, {pipeline_mode = #tpu.pipeline_mode<synchronous>, transform_indices = @transform_1, window_bounds = array<i64: 16, 32>}, {pipeline_mode = #tpu.pipeline_mode<synchronous>, transform_indices = @transform_2, window_bounds = array<i64: 1, 32>}, {pipeline_mode = #tpu.pipeline_mode<synchronous>, transform_indices = @transform_3, window_bounds = array<i64: 2, 32>}]} {
    %c0 = arith.constant 0 : index
    %c0_0 = arith.constant 0 : index
    %0 = vector.load %arg1[%c0, %c0_0] : memref<2x16xf32, #tpu.memory_space<vmem>>, vector<2x16xf32>
    %1 = arith.negf %0 : vector<2x16xf32>
    %2 = math.exp %1 : vector<2x16xf32>
    %cst = arith.constant 1.000000e+00 : f32
    %3 = vector.broadcast %cst : f32 to vector<2x16xf32>
    %4 = arith.addf %3, %2 : vector<2x16xf32>
    %5 = arith.divf %3, %4 : vector<2x16xf32>
    %6 = arith.mulf %0, %5 : vector<2x16xf32>
    %c0_1 = arith.constant 0 : index
    %c0_2 = arith.constant 0 : index
    %7 = vector.load %arg2[%c0_1, %c0_2] : memref<16x32xf32, #tpu.memory_space<vmem>>, vector<16x32xf32>
    %cst_3 = arith.constant dense<0.000000e+00> : vector<2x32xf32>
    %8 = tpu.matmul %6, %7, %cst_3 {dimension_numbers = #tpu.dot_dimension_numbers<[1], [0], [0], [1], [0, 0, 1, 1], [], []>} : vector<2x16xf32>, vector<16x32xf32>, vector<2x32xf32> -> vector<2x32xf32>
    %c0_4 = arith.constant 0 : index
    %c0_5 = arith.constant 0 : index
    %9 = vector.load %arg3[%c0_4, %c0_5] : memref<1x32xf32, #tpu.memory_space<vmem>>, vector<1x32xf32>
    %10 = vector.broadcast %9 : vector<1x32xf32> to vector<2x32xf32>
    %11 = arith.addf %8, %10 : vector<2x32xf32>
    %c0_6 = arith.constant 0 : index
    %c0_7 = arith.constant 0 : index
    %12 = vector.load %arg4[%c0_6, %c0_7] : memref<2x32xf32, #tpu.memory_space<vmem>>, vector<2x32xf32>
    tpu.vector_store %arg4[%c0_6, %c0_7], %11 {strides = array<i32>} : memref<2x32xf32, #tpu.memory_space<vmem>>, vector<2x32xf32>,
    return
  }
  func.func @transform_0(%arg0: i32) -> (i32, i32) {
    %c0_i32 = arith.constant 0 : i32
    %c0_i32_0 = arith.constant 0 : i32
    %c0_i32_1 = arith.constant 0 : i32
    return %c0_i32, %c0_i32_0 : i32, i32
  }
  func.func @transform_1(%arg0: i32) -> (i32, i32) {
    %c0_i32 = arith.constant 0 : i32
    %c0_i32_0 = arith.constant 0 : i32
    %c0_i32_1 = arith.constant 0 : i32
    return %c0_i32, %c0_i32_0 : i32, i32
  }
  func.func @transform_2(%arg0: i32) -> (i32, i32) {
    %c0_i32 = arith.constant 0 : i32
    %c0_i32_0 = arith.constant 0 : i32
    %c0_i32_1 = arith.constant 0 : i32
    return %c0_i32, %c0_i32_0 : i32, i32
  }
  func.func @transform_3(%arg0: i32) -> (i32, i32) {
    %c0_i32 = arith.constant 0 : i32
    %c0_i32_0 = arith.constant 0 : i32
    %c0_i32_1 = arith.constant 0 : i32
    return %c0_i32, %c0_i32_0 : i32, i32
  }
}

</mosaic_0001>

<llo_original>
// kernel: tpu_custom_call.1
$region0: #{tpu_custom_call.1}
  #allocation0 [shape = 'u32[]', space=smem, size = 0x4, offset = 0x4, fixed_abs, tag = 'smem constant byte address 0x4 - core index']
  #allocation1 [shape = 'u32[72,128]{1,0:T(1,128)}', space=vmem, size = 0x9000, scoped, tag = 'internal scratch']
  %s0 = inlined_call_operand.hbm [shape: f32[2,16], index: 0, kind: input, shape index: {}]
  %s1 = inlined_call_operand.hbm [shape: f32[16,32], index: 1, kind: input, shape index: {}]
  %s2 = inlined_call_operand.vmem [shape: f32[1,32], index: 2, kind: input, shape index: {}]
  %s3 = inlined_call_operand.hbm [shape: f32[2,32], index: 3, kind: output, shape index: {}]
  %s4 = sld [smem:[#allocation0]]
  $region30: #{tpu_custom_call.1} parent=0
    _
  %s6 = ssub.s32 1, %s4
  %s7 = scalar_select 0, %s6, %s4
  $region1: #{tpu_custom_call.1} parent=0
    #allocation2 [shape = 'u8[1024]{0}', space=vmem, size = 0x400, scoped, tag = 'input window, operand 0, single buffered']
    #allocation3 [shape = 's32[1]{0}', space=sflag, size = 0x4, scoped, tag = 'scoped memory for tpu_custom_call.1']
    #allocation4 [shape = 's32[1]{0}', space=sflag, size = 0x4, scoped, tag = 'scoped memory for tpu_custom_call.1']
    #allocation5 [shape = 'u8[8192]{0}', space=vmem, size = 0x2000, scoped, tag = 'input window, operand 1, single buffered']
    #allocation6 [shape = 's32[1]{0}', space=sflag, size = 0x4, scoped, tag = 'scoped memory for tpu_custom_call.1']
    #allocation7 [shape = 'u8[1024]{0}', space=vmem, size = 0x400, scoped, tag = 'output window, operand 0, single buffered']
    %8 = vsyncpa [#allocation3], 0
    %9 = vsyncpa [#allocation6], 0
    %10 = vsyncpa [#allocation4], 0
    // Predicated region
    $region2: #{tpu_custom_call.1} parent=1 // pred_check
      _
    $region3: #{tpu_custom_call.1} parent=1 // pred_check_branch
      %12 = sbr.rel (0) target = $region5
    $region4: #{tpu_custom_call.1} parent=1 // pred_region
      %14 = vsyncadd [#allocation3], 0
      %s16 = sshll.u32 %s0, 4
      %s17 = int_to_ptr.hbm [resolvable:$true] %s16
      %s18 = sshll.u32 [#allocation2], 4
      %s19 = int_to_ptr.vmem [resolvable:$true] %s18
      %21 = dma.hbm_to_vmem [thread:$0]  %s17, 32, %s19, [#allocation3]
    $region5: #{tpu_custom_call.1} parent=1 // pred_fallthru
      _
    // Predicated region
    $region6: #{tpu_custom_call.1} parent=1 // pred_check
      _
    $region7: #{tpu_custom_call.1} parent=1 // pred_check_branch
      %23 = sbr.rel (0) target = $region9
    $region8: #{tpu_custom_call.1} parent=1 // pred_region
      %25 = vsyncadd [#allocation6], 0
      %s26 = sshll.u32 %s1, 4
      %s27 = int_to_ptr.hbm [resolvable:$true] %s26
      %s28 = sshll.u32 [#allocation5], 4
      %s29 = int_to_ptr.vmem [resolvable:$true] %s28
      %34 = dma.hbm_to_vmem [thread:$0]  %s27, 256, %s29, [#allocation6], 128, 128, 8
    $region9: #{tpu_custom_call.1} parent=1 // pred_fallthru
      _
    // Predicated region
    $region10: #{tpu_custom_call.1} parent=1 // pred_check
      _
    $region11: #{tpu_custom_call.1} parent=1 // pred_check_branch
      %36 = sbr.rel (0) target = $region13
    $region12: #{tpu_custom_call.1} parent=1 // pred_region
      _
    $region13: #{tpu_custom_call.1} parent=1 // pred_fallthru
      _
    // Predicated region
    $region14: #{tpu_custom_call.1} parent=1 // pred_check
      _
    $region15: #{tpu_custom_call.1} parent=1 // pred_check_branch
      %38 = sbr.rel (0) target = $region17
    $region16: #{tpu_custom_call.1} parent=1 // pred_region
      %40 = dma.done [#allocation3], 32
    $region17: #{tpu_custom_call.1} parent=1 // pred_fallthru
      _
    // Predicated region
    $region18: #{tpu_custom_call.1} parent=1 // pred_check
      _
    $region19: #{tpu_custom_call.1} parent=1 // pred_check_branch
      %42 = sbr.rel (0) target = $region21
    $region20: #{tpu_custom_call.1} parent=1 // pred_region
      %44 = dma.done [#allocation6], 256
    $region21: #{tpu_custom_call.1} parent=1 // pred_fallthru
      _
    %v45 = vld [vmem:[#allocation2] sm:$0x3]
    %v46 = vxor.u32 %v45, 2147483648
    %v47 = vmul.f32 %v46, 1.442695
    %v48 = vpow.pop %v47
    %v49 = vadd.f32 %v48, 1.0
    %v50 = vrcp.pop %v49
    %v51 = vmul.f32 %v49, %v50
    %v52 = vsub.f32 1.0, %v51
    %v53 = vmul.f32 %v50, %v52
    %v54 = vadd.f32 %v50, %v53
    %vm55 = vweird.f32 %v49
    %vm56 = vweird.f32 %v50
    %vm57 = vmor %vm55, %vm56
    %v58 = vsel %vm57, %v50, %v54
    %v59 = vand.u32 2147483647, %v49
    %vm60 = vcmp.eq.f32.partialorder %v59, 8.507059e+37
    %v61 = vand.u32 %v49, 2147483648
    %v62 = vor.u32 1.1754944e-38, %v61
    %v63 = vsel %vm60, %v62, %v58
    %v64 = vmul.f32 1.0, %v63
    %v65 = vmul.f32 %v45, %v64
    %v66 = vld [vmem:[#allocation5] sm:$0xff]
    %v67 = vld [vmem:[#allocation5 + $0x8] sm:$0xff]
    %v68 = vld [vmem:[%s2] sm:$0x1]
    %v70 = vperm.slane %v68, 0
    %vm72 = vcmask 130048
    %v74 = vsel %vm72, %v65, 0
    %76 = vmatpush.msra.mxu0 0.0
    %77 = vmatpush.msra.mxu0 0.0
    %78 = vmatpush.msra.mxu0 0.0
    %79 = vmatpush.msra.mxu0 0.0
    %80 = vmatpush.msra.mxu0 0.0
    %81 = vmatpush.msra.mxu0 0.0
    %82 = vmatpush.msra.mxu0 0.0
    %83 = vmatpush.msra.mxu0 0.0
    %84 = vmatpush.msra.mxu0 0.0
    %85 = vmatpush.msra.mxu0 0.0
    %86 = vmatpush.msra.mxu0 0.0
    %87 = vmatpush.msra.mxu0 0.0
    %88 = vmatpush.msra.mxu0 0.0
    %89 = vmatpush.msra.mxu0 0.0
    %90 = vmatpush.msra.mxu0 %v67
    %91 = vmatpush.msra.mxu0 %v66
    %92 = vmatmul.f32.gmra.mxu0 %v74
    %v93 = vpop.f32.mrf.mxu0
    %v94 = vadd.f32 %v70, %v93
    %95 = vdwg.mxu0
    %vm96 = vcmask 254976
    %97 = vst.msk [vmem:[#allocation7] sm:$0x3] %vm96, %v94
    // Predicated region
    $region22: #{tpu_custom_call.1} parent=1 // pred_check
      _
    $region23: #{tpu_custom_call.1} parent=1 // pred_check_branch
      %99 = sbr.rel (0) target = $region25
    $region24: #{tpu_custom_call.1} parent=1 // pred_region
      %101 = vsyncadd [#allocation4], 0
      %s103 = sshll.u32 [#allocation7], 4
      %s104 = int_to_ptr.vmem [resolvable:$true] %s103
      %s105 = sshll.u32 %s3, 4
      %s106 = int_to_ptr.hbm [resolvable:$true] %s105
      %108 = dma.vmem_to_hbm [thread:$0]  %s104, 32, %s106, [#allocation4]
    $region25: #{tpu_custom_call.1} parent=1 // pred_fallthru
      _
    // Predicated region
    $region26: #{tpu_custom_call.1} parent=1 // pred_check
      _
    $region27: #{tpu_custom_call.1} parent=1 // pred_check_branch
      %110 = sbr.rel (0) target = $region29
    $region28: #{tpu_custom_call.1} parent=1 // pred_region
      %112 = dma.done [#allocation4], 32
    $region29: #{tpu_custom_call.1} parent=1 // pred_fallthru
      _
    %113 = vsyncpa [#allocation3], 1
    %114 = vsyncpa [#allocation6], 1
    %115 = vsyncpa [#allocation4], 1

</llo_original>
